<compile_context>
chip_gen: v6e
topology: v6e:2x2x1
jax: 0.10.0
libtpu: 0.0.40
codegen_flags: <defaults>
</compile_context>

<pallas_src>
import functools

import jax
import jax.numpy as jnp
from jax import lax
from jax.experimental import pallas as pl
from jax.experimental.pallas import tpu as pltpu


def _round_up(x, m):
    return ((x + m - 1) // m) * m


def _ntxent_kernel(reps_ref, cbias_ref, out_ref, *, block_rows, b, b_pad,
                   has_pad, use_subtract_self):
    """Partial NT-Xent loss for (padded) rows [i*TM, (i+1)*TM)."""
    tm = block_rows
    n_pad = 2 * b_pad

    row_off = pl.multiple_of(pl.program_id(0) * tm, tm)
    lhs = reps_ref[pl.ds(row_off, tm), :]                        # (TM, D)

    # (TM, N_pad) similarity slab; contraction over the feature dim of BOTH
    # operands (NT matmul) feeds the MXU without a transpose.  1/temperature is
    # already folded into the operands by the wrapper.
    logits = lax.dot_general(
        lhs, reps_ref[...],
        dimension_numbers=(((1,), (1,)), ((), ())),
        preferred_element_type=jnp.float32)                      # (TM, N_pad) f32

    if has_pad:
        # 0 on valid columns, -1e30 on zero pad columns (built once in wrapper).
        logits = logits + cbias_ref[...]                         # (1, N_pad) bcast

    lhs_f32 = lhs.astype(jnp.float32)

    # Positive pair of (padded) row k is row (k + B_pad) mod 2*B_pad; both
    # halves are padded identically, so the paired block is contiguous and
    # block-aligned -> O(TM*D) elementwise dot, no O(N^2) work.
    pos_off = row_off + b_pad
    pos_off = jnp.where(pos_off >= n_pad, pos_off - n_pad, pos_off)
    pos_off = pl.multiple_of(pos_off, tm)
    pos = reps_ref[pl.ds(pos_off, tm), :].astype(jnp.float32)
    positives = jnp.sum(lhs_f32 * pos, axis=-1, keepdims=True)   # (TM, 1)

    if (not use_subtract_self) or has_pad:
        row_ids = row_off + lax.broadcasted_iota(jnp.int32, (tm, 1), 0)

    if use_subtract_self:
        # Cosine path: self-similarity == 1/T is the row maximum, so the
        # exclusive LSE is formed by an exp-domain subtract-self correction —
        # no (TM, N) iota / compare / select slab passes (review item #4).
        self_sim = jnp.sum(lhs_f32 * lhs_f32, axis=-1, keepdims=True)  # (TM, 1)
        m = jnp.maximum(jnp.max(logits, axis=-1, keepdims=True), self_sim)
        sumexp = (jnp.sum(jnp.exp(logits - m), axis=-1, keepdims=True)
                  - jnp.exp(self_sim - m))
        sumexp = jnp.maximum(sumexp, 1e-30)                      # rounding guard
    else:
        # Dot-similarity path: the self entry (||x||^2 / T) can dominate the
        # maximum, making subtract-self numerically unsafe; keep a single fused
        # masked pass (f32 throughout — see review correctness concern #1).
        col = lax.broadcasted_iota(jnp.int32, logits.shape, 1)
        masked = jnp.where(col == row_ids, -1e30, logits)
        m = jnp.max(masked, axis=-1, keepdims=True)
        sumexp = jnp.sum(jnp.exp(masked - m), axis=-1, keepdims=True)
    # NOTE: bf16 exp (v6e/v7x EUP fast path) deliberately not applied — review
    # asks for bundle-level EUP-slot verification first, and v5e has no bf16 EUP.

    lse = m + jnp.log(sumexp)                                    # (TM, 1)
    per_row = lse - positives
    if has_pad:
        # Zero the contribution of zero-padded rows (block lies in one half,
        # so the in-half index is a simple subtract, no integer mod needed).
        local = row_ids - jnp.where(row_ids >= b_pad, b_pad, 0)
        per_row = jnp.where(local < b, per_row, 0.0)

    partial = jnp.sum(per_row, axis=0, keepdims=True)            # (1, 1)
    # Lane-aligned (8, 128) store -> unmasked vst; only [0, 0] is meaningful.
    out_ref[...] = jnp.broadcast_to(partial, (8, 128))


def ntxent_loss(zis, zjs, *, batch_size, temperature, use_cosine_similarity,
                matmul_dtype=jnp.bfloat16, tm_target=None):
    assert zis.shape == zjs.shape and zis.shape[0] == batch_size
    b = batch_size
    n = 2 * b
    d = zis.shape[1]

    # ---- plain-JAX prep: one fused O(N*D) pass ------------------------------
    reps = jnp.concatenate([zjs, zis], axis=0).astype(jnp.float32)   # (N, D)
    if use_cosine_similarity:
        reps = reps * lax.rsqrt(
            jnp.sum(reps * reps, axis=-1, keepdims=True) + 1e-12)
    inv_sqrt_t = 1.0 / (float(temperature) ** 0.5)
    reps = (reps * inv_sqrt_t).astype(matmul_dtype)

    itemsize = jnp.dtype(matmul_dtype).itemsize
    align = max(8, 32 // itemsize)            # sublane packing: 8 f32 / 16 bf16

    # ---- generation-aware VMEM budget (review #3) ---------------------------
    try:
        vmem_cap = int(pltpu.get_tpu_info().vmem_capacity_bytes)
    except Exception:
        vmem_cap = 64 * 1024 * 1024           # v7x-safe fallback
    vmem_budget = int(0.85 * vmem_cap)

    if tm_target is None:                     # review #7: larger tiles on v5e/v6e
        tm_target = 512 if vmem_cap >= 100 * 1024 * 1024 else 256

    # ---- row tile + padding (review #8: no full-slab fallback) --------------
    def vmem_est(tm_):
        b_pad_ = _round_up(b, tm_)
        n_pad_ = 2 * b_pad_
        resident = n_pad_ * d * itemsize                   # single-buffered reps
        slab = 5 * tm_ * n_pad_ * 4                        # logits + exp/mask temps
        return resident + slab + n_pad_ * 4 + 2 * 8 * 128 * 4

    tm = max(align, (min(tm_target, _round_up(b, align)) // align) * align)
    while tm > align and vmem_est(tm) > vmem_budget:
        tm -= align
    # TODO(synk): for N where even TM=align overflows v7x VMEM, add flash-style
    # column tiling of the slab (review #2); row-block tiling is kept here.

    b_pad = _round_up(b, tm)
    n_pad = 2 * b_pad
    nb = n_pad // tm                          # always even -> clean 2-TC split
    has_pad = b_pad != b

    if has_pad:
        zeros = jnp.zeros((b_pad - b, d), reps.dtype)
        reps = jnp.concatenate([reps[:b], zeros, reps[b:], zeros], axis=0)

    col_idx = jnp.arange(n_pad, dtype=jnp.int32)
    cbias = jnp.where((col_idx % b_pad) < b, 0.0, -1e30)
    cbias = cbias.astype(jnp.float32).reshape(1, n_pad)

    kernel = functools.partial(
        _ntxent_kernel, block_rows=tm, b=b, b_pad=b_pad,
        has_pad=has_pad, use_subtract_self=bool(use_cosine_similarity))

    vmem_bytes = int(min(vmem_budget, max(2 * vmem_est(tm), 32 * 1024 * 1024)))

    def _run(single_buffer_resident):
        if single_buffer_resident:
            # Constant index_map -> the block never changes; a 2nd pipeline
            # buffer would only double the resident footprint (review #1).
            reps_spec = pl.BlockSpec((n_pad, d), lambda i: (0, 0),
                                     pipeline_mode=pl.Buffered(1))
            cbias_spec = pl.BlockSpec((1, n_pad), lambda i: (0, 0),
                                      pipeline_mode=pl.Buffered(1))
        else:
            reps_spec = pl.BlockSpec((n_pad, d), lambda i: (0, 0))
            cbias_spec = pl.BlockSpec((1, n_pad), lambda i: (0, 0))
        return pl.pallas_call(
            kernel,
            out_shape=jax.ShapeDtypeStruct((nb, 8, 128), jnp.float32),
            grid=(nb,),
            in_specs=[reps_spec, cbias_spec],
            out_specs=pl.BlockSpec((None, 8, 128), lambda i: (i, 0, 0)),
            compiler_params=pltpu.CompilerParams(
                dimension_semantics=("parallel",),
                vmem_limit_bytes=vmem_bytes),
            cost_estimate=pl.CostEstimate(
                flops=2 * n_pad * n_pad * d + 4 * n_pad * d,
                transcendentals=n_pad * n_pad + n_pad,
                bytes_accessed=n_pad * d * itemsize + n_pad * 4
                               + nb * 8 * 128 * 4),
        )(reps, cbias)

    try:
        partials = _run(True)
    except Exception:
        # If this runtime rejects Buffered(1), fall back to default buffering.
        partials = _run(False)

    return jnp.sum(partials[:, 0, 0]) / n


def _reference(zis, zjs, *, batch_size, temperature, use_cosine_similarity):
    """Plain-JAX mirror of the PyTorch NTXentLoss forward."""
    n = 2 * batch_size
    reps = jnp.concatenate([zjs, zis], axis=0).astype(jnp.float32)
    if use_cosine_similarity:
        reps = reps / jnp.linalg.norm(reps, axis=-1, keepdims=True)
    sim = jnp.dot(reps, reps.T, precision=lax.Precision.HIGHEST)
    l_pos = jnp.diagonal(sim, offset=batch_size)
    r_pos = jnp.diagonal(sim, offset=-batch_size)
    positives = jnp.concatenate([l_pos, r_pos]) / temperature
    masked = jnp.where(jnp.eye(n, dtype=bool), -jnp.inf, sim / temperature)
    lse = jax.scipy.special.logsumexp(masked, axis=-1)
    return jnp.sum(lse - positives) / n


if __name__ == "__main__":
    temperature = 0.5
    base_key = jax.random.PRNGKey(0)

    def _check(batch_size, dim, use_cos, matmul_dtype, rtol, atol):
        key = jax.random.fold_in(base_key,
                                 batch_size * 100000 + dim * 10 + int(use_cos))
        k1, k2 = jax.random.split(key)
        zis = jax.random.normal(k1, (batch_size, dim), dtype=jnp.float32)
        zjs = jax.random.normal(k2, (batch_size, dim), dtype=jnp.float32)
        loss = ntxent_loss(zis, zjs, batch_size=batch_size,
                           temperature=temperature,
                           use_cosine_similarity=use_cos,
                           matmul_dtype=matmul_dtype)
        loss = jax.block_until_ready(loss)
        ref = _reference(zis, zjs, batch_size=batch_size,
                         temperature=temperature,
                         use_cosine_similarity=use_cos)
        assert jnp.allclose(loss, ref, rtol=rtol, atol=atol), (
            batch_size, dim, use_cos, str(matmul_dtype), float(loss), float(ref))

    # Aligned batch (no padding), both similarity modes, f32 MXU inputs.
    _check(16, 128, True, jnp.float32, 1e-2, 2e-2)
    _check(16, 128, False, jnp.float32, 1e-2, 2e-2)
    # Default fast path: bf16 MXU inputs with f32 accumulation.
    _check(16, 128, True, jnp.bfloat16, 5e-2, 1e-1)
    _check(16, 128, False, jnp.bfloat16, 5e-2, 1e-1)
    # Non-aligned batch -> padded tiled path (replaces the old full-slab fallback).
    _check(4, 64, True, jnp.float32, 1e-2, 2e-2)
    _check(4, 64, False, jnp.float32, 1e-2, 2e-2)
    _check(4, 64, True, jnp.bfloat16, 5e-2, 1e-1)

    print("KERNEL_OK")
</pallas_src>

<mosaic_0001>
module attributes {stable_mosaic.version = 11 : i64} {
  func.func @_ntxent_kernel(%arg0: i32, %arg1: memref<32x128xf32, #tpu.memory_space<vmem>>, %arg2: memref<1x32xf32, #tpu.memory_space<vmem>>, %arg3: memref<1x8x128xf32, #tpu.memory_space<vmem>>) attributes {dimension_semantics = [#tpu.dimension_semantics<parallel>], iteration_bounds = array<i64: 2>, scalar_prefetch = 0 : i64, scratch_operands = 0 : i64, tpu.core_type = #tpu.core_type<tc>, window_params = [{pipeline_mode = #tpu.pipeline_mode<synchronous>, transform_indices = @transform_0, window_bounds = array<i64: 32, 128>}, {pipeline_mode = #tpu.pipeline_mode<synchronous>, transform_indices = @transform_1, window_bounds = array<i64: 1, 32>}, {transform_indices = @transform_2, window_bounds = array<i64: 1, 8, 128>}]} {
    %c16_i32 = arith.constant 16 : i32
    %0 = arith.muli %arg0, %c16_i32 : i32
    %1 = tpu.assume_multiple %0, 16 : i32
    %2 = arith.index_cast %1 : i32 to index
    %c0 = arith.constant 0 : index
    %3 = vector.load %arg1[%2, %c0] : memref<32x128xf32, #tpu.memory_space<vmem>>, vector<16x128xf32>
    %c0_0 = arith.constant 0 : index
    %c0_1 = arith.constant 0 : index
    %4 = vector.load %arg1[%c0_0, %c0_1] : memref<32x128xf32, #tpu.memory_space<vmem>>, vector<32x128xf32>
    %cst = arith.constant dense<0.000000e+00> : vector<16x32xf32>
    %5 = tpu.matmul %3, %4, %cst {dimension_numbers = #tpu.dot_dimension_numbers<[1], [1], [0], [0], [0, 0, 1, 0], [], []>} : vector<16x128xf32>, vector<32x128xf32>, vector<16x32xf32> -> vector<16x32xf32>
    %c16_i32_2 = arith.constant 16 : i32
    %6 = arith.addi %1, %c16_i32_2 : i32
    %c32_i32 = arith.constant 32 : i32
    %7 = arith.cmpi sge, %6, %c32_i32 : i32
    %c32_i32_3 = arith.constant 32 : i32
    %8 = arith.subi %6, %c32_i32_3 : i32
    %9 = arith.select %7, %8, %6 : i32
    %10 = tpu.assume_multiple %9, 16 : i32
    %11 = arith.index_cast %10 : i32 to index
    %c0_4 = arith.constant 0 : index
    %12 = vector.load %arg1[%11, %c0_4] : memref<32x128xf32, #tpu.memory_space<vmem>>, vector<16x128xf32>
    %13 = arith.mulf %3, %12 : vector<16x128xf32>
    %cst_5 = arith.constant dense<0.000000e+00> : vector<16xf32>
    %14 = vector.multi_reduction <add>, %13, %cst_5 [1] : vector<16x128xf32> to vector<16xf32>
    %15 = vector.shape_cast %14 : vector<16xf32> to vector<16x1xf32>
    %16 = arith.mulf %3, %3 : vector<16x128xf32>
    %cst_6 = arith.constant dense<0.000000e+00> : vector<16xf32>
    %17 = vector.multi_reduction <add>, %16, %cst_6 [1] : vector<16x128xf32> to vector<16xf32>
    %18 = vector.shape_cast %17 : vector<16xf32> to vector<16x1xf32>
    %cst_7 = arith.constant dense<0xFF800000> : vector<16xf32>
    %19 = vector.multi_reduction <maximumf>, %5, %cst_7 [1] : vector<16x32xf32> to vector<16xf32>
    %20 = vector.shape_cast %19 : vector<16xf32> to vector<16x1xf32>
    %21 = arith.maximumf %20, %18 : vector<16x1xf32>
    %22 = vector.broadcast %21 : vector<16x1xf32> to vector<16x32xf32>
    %23 = arith.subf %5, %22 : vector<16x32xf32>
    %24 = math.exp %23 : vector<16x32xf32>
    %cst_8 = arith.constant dense<0.000000e+00> : vector<16xf32>
    %25 = vector.multi_reduction <add>, %24, %cst_8 [1] : vector<16x32xf32> to vector<16xf32>
    %26 = vector.shape_cast %25 : vector<16xf32> to vector<16x1xf32>
    %27 = arith.subf %18, %21 : vector<16x1xf32>
    %28 = math.exp %27 : vector<16x1xf32>
    %29 = arith.subf %26, %28 : vector<16x1xf32>
    %cst_9 = arith.constant 1.000000e-30 : f32
    %30 = vector.broadcast %cst_9 : f32 to vector<16x1xf32>
    %31 = arith.maximumf %29, %30 : vector<16x1xf32>
    %32 = math.log %31 : vector<16x1xf32>
    %33 = arith.addf %21, %32 : vector<16x1xf32>
    %34 = arith.subf %33, %15 : vector<16x1xf32>
    %cst_10 = arith.constant dense<0.000000e+00> : vector<1xf32>
    %35 = vector.multi_reduction <add>, %34, %cst_10 [0] : vector<16x1xf32> to vector<1xf32>
    %36 = vector.shape_cast %35 : vector<1xf32> to vector<1x1xf32>
    %37 = vector.shape_cast %36 : vector<1x1xf32> to vector<1x1xf32>
    %38 = vector.broadcast %37 : vector<1x1xf32> to vector<8x128xf32>
    %c0_11 = arith.constant 0 : index
    %c0_12 = arith.constant 0 : index
    %c0_13 = arith.constant 0 : index
    %39 = vector.load %arg3[%c0_11, %c0_12, %c0_13] : memref<1x8x128xf32, #tpu.memory_space<vmem>>, vector<1x8x128xf32>
    %40 = vector.shape_cast %39 : vector<1x8x128xf32> to vector<8x128xf32>
    %41 = vector.shape_cast %38 : vector<8x128xf32> to vector<1x8x128xf32>
    tpu.vector_store %arg3[%c0_11, %c0_12, %c0_13], %41 {strides = array<i32>} : memref<1x8x128xf32, #tpu.memory_space<vmem>>, vector<1x8x128xf32>,
    return
  }
  func.func @transform_0(%arg0: i32) -> (i32, i32) {
    %c0_i32 = arith.constant 0 : i32
    %c0_i32_0 = arith.constant 0 : i32
    %c0_i32_1 = arith.constant 0 : i32
    return %c0_i32, %c0_i32_0 : i32, i32
  }
  func.func @transform_1(%arg0: i32) -> (i32, i32) {
    %c0_i32 = arith.constant 0 : i32
    %c0_i32_0 = arith.constant 0 : i32
    %c0_i32_1 = arith.constant 0 : i32
    return %c0_i32, %c0_i32_0 : i32, i32
  }
  func.func @transform_2(%arg0: i32) -> (i32, i32, i32) {
    %c0_i32 = arith.constant 0 : i32
    %c0_i32_0 = arith.constant 0 : i32
    %c0_i32_1 = arith.constant 0 : i32
    return %arg0, %c0_i32, %c0_i32_0 : i32, i32, i32
  }
}

module attributes {stable_mosaic.version = 11 : i64} {
  func.func @_ntxent_kernel(%arg0: i32, %arg1: memref<32x128xf32, #tpu.memory_space<vmem>>, %arg2: memref<1x32xf32, #tpu.memory_space<vmem>>, %arg3: memref<1x8x128xf32, #tpu.memory_space<vmem>>) attributes {dimension_semantics = [#tpu.dimension_semantics<parallel>], iteration_bounds = array<i64: 2>, scalar_prefetch = 0 : i64, scratch_operands = 0 : i64, tpu.core_type = #tpu.core_type<tc>, window_params = [{pipeline_mode = #tpu.pipeline_mode<synchronous>, transform_indices = @transform_0, window_bounds = array<i64: 32, 128>}, {pipeline_mode = #tpu.pipeline_mode<synchronous>, transform_indices = @transform_1, window_bounds = array<i64: 1, 32>}, {transform_indices = @transform_2, window_bounds = array<i64: 1, 8, 128>}]} {
    %c16_i32 = arith.constant 16 : i32
    %0 = arith.muli %arg0, %c16_i32 : i32
    %1 = tpu.assume_multiple %0, 16 : i32
    %2 = arith.index_cast %1 : i32 to index
    %c0 = arith.constant 0 : index
    %3 = vector.load %arg1[%2, %c0] : memref<32x128xf32, #tpu.memory_space<vmem>>, vector<16x128xf32>
    %c0_0 = arith.constant 0 : index
    %c0_1 = arith.constant 0 : index
    %4 = vector.load %arg1[%c0_0, %c0_1] : memref<32x128xf32, #tpu.memory_space<vmem>>, vector<32x128xf32>
    %cst = arith.constant dense<0.000000e+00> : vector<16x32xf32>
    %5 = tpu.matmul %3, %4, %cst {dimension_numbers = #tpu.dot_dimension_numbers<[1], [1], [0], [0], [0, 0, 1, 0], [], []>} : vector<16x128xf32>, vector<32x128xf32>, vector<16x32xf32> -> vector<16x32xf32>
    %c16_i32_2 = arith.constant 16 : i32
    %6 = arith.addi %1, %c16_i32_2 : i32
    %c32_i32 = arith.constant 32 : i32
    %7 = arith.cmpi sge, %6, %c32_i32 : i32
    %c32_i32_3 = arith.constant 32 : i32
    %8 = arith.subi %6, %c32_i32_3 : i32
    %9 = arith.select %7, %8, %6 : i32
    %10 = tpu.assume_multiple %9, 16 : i32
    %11 = arith.index_cast %10 : i32 to index
    %c0_4 = arith.constant 0 : index
    %12 = vector.load %arg1[%11, %c0_4] : memref<32x128xf32, #tpu.memory_space<vmem>>, vector<16x128xf32>
    %13 = arith.mulf %3, %12 : vector<16x128xf32>
    %cst_5 = arith.constant dense<0.000000e+00> : vector<16xf32>
    %14 = vector.multi_reduction <add>, %13, %cst_5 [1] : vector<16x128xf32> to vector<16xf32>
    %15 = vector.shape_cast %14 : vector<16xf32> to vector<16x1xf32>
    %16 = arith.mulf %3, %3 : vector<16x128xf32>
    %cst_6 = arith.constant dense<0.000000e+00> : vector<16xf32>
    %17 = vector.multi_reduction <add>, %16, %cst_6 [1] : vector<16x128xf32> to vector<16xf32>
    %18 = vector.shape_cast %17 : vector<16xf32> to vector<16x1xf32>
    %cst_7 = arith.constant dense<0xFF800000> : vector<16xf32>
    %19 = vector.multi_reduction <maximumf>, %5, %cst_7 [1] : vector<16x32xf32> to vector<16xf32>
    %20 = vector.shape_cast %19 : vector<16xf32> to vector<16x1xf32>
    %21 = arith.maximumf %20, %18 : vector<16x1xf32>
    %22 = vector.broadcast %21 : vector<16x1xf32> to vector<16x32xf32>
    %23 = arith.subf %5, %22 : vector<16x32xf32>
    %24 = math.exp %23 : vector<16x32xf32>
    %cst_8 = arith.constant dense<0.000000e+00> : vector<16xf32>
    %25 = vector.multi_reduction <add>, %24, %cst_8 [1] : vector<16x32xf32> to vector<16xf32>
    %26 = vector.shape_cast %25 : vector<16xf32> to vector<16x1xf32>
    %27 = arith.subf %18, %21 : vector<16x1xf32>
    %28 = math.exp %27 : vector<16x1xf32>
    %29 = arith.subf %26, %28 : vector<16x1xf32>
    %cst_9 = arith.constant 1.000000e-30 : f32
    %30 = vector.broadcast %cst_9 : f32 to vector<16x1xf32>
    %31 = arith.maximumf %29, %30 : vector<16x1xf32>
    %32 = math.log %31 : vector<16x1xf32>
    %33 = arith.addf %21, %32 : vector<16x1xf32>
    %34 = arith.subf %33, %15 : vector<16x1xf32>
    %cst_10 = arith.constant dense<0.000000e+00> : vector<1xf32>
    %35 = vector.multi_reduction <add>, %34, %cst_10 [0] : vector<16x1xf32> to vector<1xf32>
    %36 = vector.shape_cast %35 : vector<1xf32> to vector<1x1xf32>
    %37 = vector.shape_cast %36 : vector<1x1xf32> to vector<1x1xf32>
    %38 = vector.broadcast %37 : vector<1x1xf32> to vector<8x128xf32>
    %c0_11 = arith.constant 0 : index
    %c0_12 = arith.constant 0 : index
    %c0_13 = arith.constant 0 : index
    %39 = vector.load %arg3[%c0_11, %c0_12, %c0_13] : memref<1x8x128xf32, #tpu.memory_space<vmem>>, vector<1x8x128xf32>
    %40 = vector.shape_cast %39 : vector<1x8x128xf32> to vector<8x128xf32>
    %41 = vector.shape_cast %38 : vector<8x128xf32> to vector<1x8x128xf32>
    tpu.vector_store %arg3[%c0_11, %c0_12, %c0_13], %41 {strides = array<i32>} : memref<1x8x128xf32, #tpu.memory_space<vmem>>, vector<1x8x128xf32>,
    return
  }
  func.func @transform_0(%arg0: i32) -> (i32, i32) {
    %c0_i32 = arith.constant 0 : i32
    %c0_i32_0 = arith.constant 0 : i32
    %c0_i32_1 = arith.constant 0 : i32
    return %c0_i32, %c0_i32_0 : i32, i32
  }
  func.func @transform_1(%arg0: i32) -> (i32, i32) {
    %c0_i32 = arith.constant 0 : i32
    %c0_i32_0 = arith.constant 0 : i32
    %c0_i32_1 = arith.constant 0 : i32
    return %c0_i32, %c0_i32_0 : i32, i32
  }
  func.func @transform_2(%arg0: i32) -> (i32, i32, i32) {
    %c0_i32 = arith.constant 0 : i32
    %c0_i32_0 = arith.constant 0 : i32
    %c0_i32_1 = arith.constant 0 : i32
    return %arg0, %c0_i32, %c0_i32_0 : i32, i32, i32
  }
}

</mosaic_0001>

<llo_original>
// kernel: tpu_custom_call.1
$region0: #{tpu_custom_call.1}
  #allocation0 [shape = 'u32[]', space=smem, size = 0x4, offset = 0x4, fixed_abs, tag = 'smem constant byte address 0x4 - core index']
  #allocation1 [shape = 'u32[144,128]{1,0:T(1,128)}', space=vmem, size = 0x12000, scoped, tag = 'internal scratch']
  %s0 = inlined_call_operand.hbm [shape: f32[32,128], index: 0, kind: input, shape index: {}]
  %s1 = inlined_call_operand.vmem [shape: f32[1,32], index: 1, kind: input, shape index: {}]
  %s2 = inlined_call_operand.hbm [shape: f32[2,8,128], index: 2, kind: output, shape index: {}]
  %s3 = sld [smem:[#allocation0]]
  $region45: #{tpu_custom_call.1} parent=0
    _
  %s5 = ssub.s32 1, %s3
  %s6 = scalar_select 0, %s5, %s3
  $region1: #{tpu_custom_call.1} parent=0
    #allocation2 [shape = 'u8[16384]{0}', space=vmem, size = 0x4000, scoped, tag = 'input window, operand 0, single buffered']
    #allocation3 [shape = 's32[2]{0}', space=sflag, size = 0x8, scoped, tag = 'scoped memory for tpu_custom_call.1']
    #allocation4 [shape = 's32[2]{0}', space=sflag, size = 0x8, scoped, tag = 'scoped memory for tpu_custom_call.1']
    #allocation5 [shape = 'u8[8192]{0}', space=vmem, size = 0x2000, scoped, tag = 'output window, operand 0']
    %7 = vsyncpa [#allocation3], 0
    %8 = vsyncpa [#allocation4], 0
    %s9 = scalar_lea.sflag [#allocation4], 1
    %10 = vsyncpa %s9, 0
    loop: start=0, step=1, limit=4
    $region2: #{tpu_custom_call.1} parent=1 // loop_pre_header
      _
    $region3: #{tpu_custom_call.1} parent=1 // loop_header
      %s12 = sphi 0, %s16
      %p13 = scmp.ge.s32.totalorder %s12, 4
      %s20 = sphi 0, %s20
      %s22 = sphi 0, %s20
      %s23 = sphi 0, %s22
      %s37 = sphi 0, %s23
      %s41 = sphi 0, %s41
      %s43 = sphi 0, %s41
      %s44 = sphi 0, %s43
      %s58 = sphi 0, %s44
      %s64 = sphi 0, %s66
      %s67 = sphi 0, %s64
      %s68 = sphi 0, %s67
      %s84 = sphi 0, %s68
    $region4: #{tpu_custom_call.1} parent=1 // loop_header_branch
      %15 = sbr.rel (%p13) target = $region8
    $region5: #{tpu_custom_call.1} parent=1 // loop_body
      %s17 = ssub.s32 %s12, 1
      %s18 = ssub.s32 %s12, 2
      %s19 = sadd.s32 %s12, 1
      %s21 = sadd.s32 %s20, 1
      %p24 = scmp.eq.s32.totalorder %s12, 1
      %p25 = scmp.ne.s32.totalorder %s20, %s22
      %p26 = scmp.eq.s32.totalorder %s12, 0
      %p27 = por %p25, %p26
      %p28 = scmp.ne.s32.totalorder %s20, %s22
      %p29 = scmp.eq.s32.totalorder %s17, 1
      %p30 = por %p28, %p29
      %p31 = scmp.ne.s32.totalorder %s22, %s23
      %p32 = scmp.eq.s32.totalorder %s17, 0
      %p33 = por %p31, %p32
      %p34 = scmp.ne.s32.totalorder %s22, %s23
      %p35 = scmp.eq.s32.totalorder %s18, 1
      %p36 = por %p34, %p35
      %p38 = scmp.ne.s32.totalorder %s23, %s37
      %p39 = scmp.eq.s32.totalorder %s18, 0
      %p40 = por %p38, %p39
      %s42 = sadd.s32 %s41, 1
      %p45 = scmp.eq.s32.totalorder %s12, 1
      %p46 = scmp.ne.s32.totalorder %s41, %s43
      %p47 = scmp.eq.s32.totalorder %s12, 0
      %p48 = por %p46, %p47
      %p49 = scmp.ne.s32.totalorder %s41, %s43
      %p50 = scmp.eq.s32.totalorder %s17, 1
      %p51 = por %p49, %p50
      %p52 = scmp.ne.s32.totalorder %s43, %s44
      %p53 = scmp.eq.s32.totalorder %s17, 0
      %p54 = por %p52, %p53
      %p55 = scmp.ne.s32.totalorder %s43, %s44
      %p56 = scmp.eq.s32.totalorder %s18, 1
      %p57 = por %p55, %p56
      %p59 = scmp.ne.s32.totalorder %s44, %s58
      %p60 = scmp.eq.s32.totalorder %s18, 0
      %p61 = por %p59, %p60
      %s62 = ssub.s32 %s12, %s19
      %p63 = scmp.eq.s32.totalorder %s62, 0
      %s65 = sadd.s32 %s64, 1
      %s66 = scalar_select %p63, %s64, %s65
      %p69 = pneg %p63
      %p70 = scmp.eq.s32.totalorder %s12, 1
      %p71 = por %p69, %p70
      %p72 = scmp.ne.s32.totalorder %s64, %s67
      %p73 = scmp.eq.s32.totalorder %s12, 0
      %p74 = por %p72, %p73
      %p75 = scmp.ne.s32.totalorder %s64, %s67
      %p76 = scmp.eq.s32.totalorder %s17, 1
      %p77 = por %p75, %p76
      %p78 = scmp.ne.s32.totalorder %s67, %s68
      %p79 = scmp.eq.s32.totalorder %s17, 0
      %p80 = por %p78, %p79
      %p81 = scmp.ne.s32.totalorder %s67, %s68
      %p82 = scmp.eq.s32.totalorder %s18, 1
      %p83 = por %p81, %p82
      %p85 = scmp.ne.s32.totalorder %s68, %s84
      %p86 = scmp.eq.s32.totalorder %s18, 0
      %p87 = por %p85, %p86
      %p88 = scmp.le.s32.totalorder 1, %s12
      %p89 = scmp.lt.s32.totalorder %s12, 3
      %p90 = pnand %p88, %p89
      %p91 = pneg %p90
      // Predicated region
      $region9: #{tpu_custom_call.1} parent=5 // pred_check
        _
      $region10: #{tpu_custom_call.1} parent=5 // pred_check_branch
        %93 = sbr.rel (%p90) target = $region12
      $region11: #{tpu_custom_call.1} parent=5 // pred_region
        %s94 = ssub.s32 %s12, 1
        // Predicated region
        $region13: #{tpu_custom_call.1} parent=11 // pred_check
          %p95 = pneg %p33
        $region14: #{tpu_custom_call.1} parent=11 // pred_check_branch
          %97 = sbr.rel (%p95) target = $region16
        $region15: #{tpu_custom_call.1} parent=11 // pred_region
          %s99 = ssub.s32 512, 512
          %100 = vsyncadd [#allocation3], %s99
          %s101 = sshll.u32 [#allocation2], 4
          %s102 = int_to_ptr.vmem [resolvable:$true] %s101
          %107 = dma.hbm_to_vmem [thread:$0]  %s0, 512, %s102, [#allocation3], 128, 128, 8
        $region16: #{tpu_custom_call.1} parent=11 // pred_fallthru
          _
        // Predicated region
        $region17: #{tpu_custom_call.1} parent=11 // pred_check
          %p108 = pneg %p54
        $region18: #{tpu_custom_call.1} parent=11 // pred_check_branch
          %110 = sbr.rel (%p108) target = $region20
        $region19: #{tpu_custom_call.1} parent=11 // pred_region
          _
        $region20: #{tpu_custom_call.1} parent=11 // pred_fallthru
          _
      $region12: #{tpu_custom_call.1} parent=5 // pred_fallthru
        _
      %p111 = scmp.lt.s32.totalorder %s12, 2
      // Predicated region
      $region21: #{tpu_custom_call.1} parent=5 // pred_check
        %p112 = pneg %p111
      $region22: #{tpu_custom_call.1} parent=5 // pred_check_branch
        %114 = sbr.rel (%p112) target = $region24
      $region23: #{tpu_custom_call.1} parent=5 // pred_region
        _
      $region24: #{tpu_custom_call.1} parent=5 // pred_fallthru
        _
      %p115 = scmp.le.s32.totalorder 1, %s12
      %p116 = scmp.lt.s32.totalorder %s12, 3
      %p117 = pnand %p115, %p116
      %p118 = pneg %p117
      // Predicated region
      $region25: #{tpu_custom_call.1} parent=5 // pred_check
        _
      $region26: #{tpu_custom_call.1} parent=5 // pred_check_branch
        %120 = sbr.rel (%p117) target = $region28
      $region27: #{tpu_custom_call.1} parent=5 // pred_region
        %s121 = ssub.s32 %s12, 1
        // Predicated region
        $region29: #{tpu_custom_call.1} parent=27 // pred_check
          %p122 = pneg %p33
        $region30: #{tpu_custom_call.1} parent=27 // pred_check_branch
          %124 = sbr.rel (%p122) target = $region32
        $region31: #{tpu_custom_call.1} parent=27 // pred_region
          %125 = dma.done [#allocation3], 512
        $region32: #{tpu_custom_call.1} parent=27 // pred_fallthru
          _
        %p126 = pneg %p33
        %p127 = pneg %p30
        %p128 = pneg %p54
        %p129 = pneg %p51
        %p130 = pneg %p80
        %p131 = pneg %p77
        %s132 = sand.u32 %s67, 1
        %s133 = scalar_lea.sflag [#allocation4], %s132
        %s134 = sand.u32 %s67, 1
        %s135 = smul.addr %s134, 8
        %s136 = scalar_lea.vmem [#allocation5], %s135
        %s137 = smul.u32 %s17, 16
        %s138 = scalar_lea.vmem [#allocation2], %s137
        %v139 = vld [vmem:[%s138] sm:$0xff]
        %v140 = vld [vmem:[%s138 + $0x8] sm:$0xff]
        %v141 = vld [vmem:[#allocation2] sm:$0xff]
        %v142 = vld [vmem:[#allocation2 + $0x8] sm:$0xff]
        %v143 = vld [vmem:[#allocation2 + $0x10] sm:$0xff]
        %v144 = vld [vmem:[#allocation2 + $0x18] sm:$0xff]
        %145 = vmatprep.subr.mxu0 0.0
        %146 = vmatpush1.xpose.msra.mxu0 0.0
        %147 = vmatprep.subr.mxu0 0.0
        %148 = vmatpush1.xpose.msra.mxu0 0.0
        %149 = vmatprep.subr.mxu0 0.0
        %150 = vmatpush1.xpose.msra.mxu0 0.0
        %151 = vmatprep.subr.mxu0 0.0
        %152 = vmatpush1.xpose.msra.mxu0 0.0
        %153 = vmatprep.subr.mxu0 0.0
        %154 = vmatpush1.xpose.msra.mxu0 0.0
        %155 = vmatprep.subr.mxu0 0.0
        %156 = vmatpush1.xpose.msra.mxu0 0.0
        %157 = vmatprep.subr.mxu0 0.0
        %158 = vmatpush1.xpose.msra.mxu0 0.0
        %159 = vmatprep.subr.mxu0 0.0
        %160 = vmatpush1.xpose.msra.mxu0 0.0
        %161 = vmatprep.subr.mxu0 0.0
        %162 = vmatpush1.xpose.msra.mxu0 0.0
        %163 = vmatprep.subr.mxu0 0.0
        %164 = vmatpush1.xpose.msra.mxu0 0.0
        %165 = vmatprep.subr.mxu0 0.0
        %166 = vmatpush1.xpose.msra.mxu0 0.0
        %167 = vmatprep.subr.mxu0 0.0
        %168 = vmatpush1.xpose.msra.mxu0 0.0
        %169 = vmatprep.subr.mxu0 0.0
        %170 = vmatpush1.xpose.msra.mxu0 %v144
        %171 = vmatprep.subr.mxu0 0.0
        %172 = vmatpush1.xpose.msra.mxu0 %v143
        %173 = vmatprep.subr.mxu0 0.0
        %174 = vmatpush1.xpose.msra.mxu0 %v142
        %175 = vmatprep.subr.mxu0 0.0
        %176 = vmatpush1.xpose.msra.mxu0 %v141
        %177 = vmatprep.subr.mxu0 0.0
        %178 = vmatpush2.xpose.msra.mxu0 0.0
        %179 = vmatprep.subr.mxu0 0.0
        %180 = vmatpush2.xpose.msra.mxu0 0.0
        %181 = vmatprep.subr.mxu0 0.0
        %182 = vmatpush2.xpose.msra.mxu0 0.0
        %183 = vmatprep.subr.mxu0 0.0
        %184 = vmatpush2.xpose.msra.mxu0 0.0
        %185 = vmatprep.subr.mxu0 0.0
        %186 = vmatpush2.xpose.msra.mxu0 0.0
        %187 = vmatprep.subr.mxu0 0.0
        %188 = vmatpush2.xpose.msra.mxu0 0.0
        %189 = vmatprep.subr.mxu0 0.0
        %190 = vmatpush2.xpose.msra.mxu0 0.0
        %191 = vmatprep.subr.mxu0 0.0
        %192 = vmatpush2.xpose.msra.mxu0 0.0
        %193 = vmatprep.subr.mxu0 0.0
        %194 = vmatpush2.xpose.msra.mxu0 0.0
        %195 = vmatprep.subr.mxu0 0.0
        %196 = vmatpush2.xpose.msra.mxu0 0.0
        %197 = vmatprep.subr.mxu0 0.0
        %198 = vmatpush2.xpose.msra.mxu0 0.0
        %199 = vmatprep.subr.mxu0 0.0
        %200 = vmatpush2.xpose.msra.mxu0 0.0
        %201 = vmatprep.subr.mxu0 0.0
        %202 = vmatpush2.xpose.msra.mxu0 0.0
        %203 = vmatprep.subr.mxu0 0.0
        %204 = vmatpush2.xpose.msra.mxu0 0.0
        %205 = vmatprep.subr.mxu0 0.0
        %206 = vmatpush2.xpose.msra.mxu0 0.0
        %207 = vmatprep.subr.mxu0 0.0
        %208 = vmatpush2.xpose.msra.mxu0 0.0
        %209 = vmatprep.mubr.f32.mxu0 0.0
        %210 = vmatmul.mubr.f32.gmra.mxu0 %v139
        %v211 = vpop.f32.mrf.mxu0
        %v212 = vadd.f32 0.0, %v211
        %v213 = vpop.f32.mrf.mxu0
        %214 = vmatprep.mubr.f32.mxu0 0.0
        %215 = vmatmul.mubr.f32.gmra.mxu0 %v140
        %v216 = vpop.f32.mrf.mxu0
        %v217 = vadd.f32 0.0, %v216
        %v218 = vpop.f32.mrf.mxu0
        %219 = vdwg.mxu0
        %s220 = sadd.s32 %s137, 16
        %p221 = scmp.ge.s32.totalorder %s220, 32
        %s222 = sadd.s32 %s137, 4294967280
        %s223 = scalar_select %p221, %s222, %s220
        %s224 = scalar_lea.vmem [#allocation2], %s223
        %v225 = vld [vmem:[%s224] sm:$0xff]
        %v226 = vld [vmem:[%s224 + $0x8] sm:$0xff]
        %v227 = vmul.f32 %v139, %v225
        %v228 = vmul.f32 %v140, %v226
        %229 = vadd.xlane.f32.xlu0 %v227
        %v230 = vpop.xlane.xlu0 %229
        %231 = vadd.xlane.f32.xlu0 %v228
        %v232 = vpop.xlane.xlu0 %231
        %v233 = vmul.f32 %v139, %v139
        %v234 = vmul.f32 %v140, %v140
        %235 = vadd.xlane.f32.xlu0 %v233
        %v236 = vpop.xlane.xlu0 %235
        %237 = vadd.xlane.f32.xlu0 %v234
        %v238 = vpop.xlane.xlu0 %237
        %vm239 = vcmask 261120
        %v240 = vsel %vm239, %v212, -inf
        %241 = vmax.xlane.f32.xlu0 %v240
        %v242 = vpop.xlane.xlu0 %241
        %v243 = vsel %vm239, %v217, -inf
        %244 = vmax.xlane.f32.xlu0 %v243
        %v245 = vpop.xlane.xlu0 %244
        %v246 = vmax.f32 %v242, %v236
        %v247 = vmax.f32 %v245, %v238
        %v248 = vsub.f32 %v212, %v246
        %v249 = vsub.f32 %v217, %v247
        %v250 = vmul.f32 %v248, 1.442695
        %v251 = vpow.pop %v250
        %v252 = vmul.f32 %v249, 1.442695
        %v253 = vpow.pop %v252
        %v254 = vsel %vm239, %v251, 0.0
        %255 = vadd.xlane.f32.xlu0 %v254
        %v256 = vpop.xlane.xlu0 %255
        %v257 = vsel %vm239, %v253, 0.0
        %258 = vadd.xlane.f32.xlu0 %v257
        %v259 = vpop.xlane.xlu0 %258
        %v260 = vsub.f32 %v236, %v246
        %v261 = vsub.f32 %v238, %v247
        %v262 = vmul.f32 %v260, 1.442695
        %v263 = vpow.pop %v262
        %v264 = vmul.f32 %v261, 1.442695
        %v265 = vpow.pop %v264
        %v266 = vsub.f32 %v256, %v263
        %v267 = vsub.f32 %v259, %v265
        %v268 = vmax.f32 %v266, 1e-30
        %v269 = vmax.f32 %v267, 1e-30
        %v270 = vlog2.pop %v268
        %v271 = vmul.f32 %v270, 0.6931472
        %v272 = vlog2.pop %v269
        %v273 = vmul.f32 %v272, 0.6931472
        %v274 = vadd.f32 %v246, %v271
        %v275 = vadd.f32 %v247, %v273
        %v276 = vsub.f32 %v274, %v230
        %v277 = vsub.f32 %v275, %v232
        %v278 = vadd.f32 %v276, %v277
        %v279 = vrot.slane %v278, 4
        %v280 = vadd.f32 %v278, %v279
        %v281 = vrot.slane %v280, 2
        %v282 = vadd.f32 %v280, %v281
        %v283 = vrot.slane %v282, 1
        %v284 = vadd.f32 %v282, %v283
        %285 = vst [vmem:[%s136] sm:$0xff] %v284
        %s286 = sand.u32 %s67, 1
        %s287 = scalar_lea.sflag [#allocation4], %s286
        %s288 = sand.u32 %s67, 1
        %s289 = smul.addr %s288, 8
        %s290 = scalar_lea.vmem [#allocation5], %s289
        // Predicated region
        $region33: #{tpu_custom_call.1} parent=27 // pred_check
          %p291 = pneg %p77
        $region34: #{tpu_custom_call.1} parent=27 // pred_check_branch
          %293 = sbr.rel (%p291) target = $region36
        $region35: #{tpu_custom_call.1} parent=27 // pred_region
          %s295 = ssub.s32 128, 128
          %296 = vsyncadd %s287, %s295
          %s297 = smul.addr %s17, 128
          %s298 = scalar_lea.hbm %s2, %s297
          %s300 = sshll.u32 %s290, 4
          %s301 = int_to_ptr.vmem [resolvable:$true] %s300
          %303 = dma.vmem_to_hbm [thread:$0]  %s301, 128, %s298, %s287
        $region36: #{tpu_custom_call.1} parent=27 // pred_fallthru
          _
      $region28: #{tpu_custom_call.1} parent=5 // pred_fallthru
        _
      %p304 = scmp.le.s32.totalorder 2, %s12
      // Predicated region
      $region37: #{tpu_custom_call.1} parent=5 // pred_check
        %p305 = pneg %p304
      $region38: #{tpu_custom_call.1} parent=5 // pred_check_branch
        %307 = sbr.rel (%p305) target = $region40
      $region39: #{tpu_custom_call.1} parent=5 // pred_region
        %s308 = ssub.s32 %s12, 2
        // Predicated region
        $region41: #{tpu_custom_call.1} parent=39 // pred_check
          %p309 = pneg %p83
        $region42: #{tpu_custom_call.1} parent=39 // pred_check_branch
          %311 = sbr.rel (%p309) target = $region44
        $region43: #{tpu_custom_call.1} parent=39 // pred_region
          %s312 = sand.u32 %s68, 1
          %s313 = scalar_lea.sflag [#allocation4], %s312
          %s314 = sand.u32 %s68, 1
          %s315 = smul.addr %s314, 8
          %s316 = scalar_lea.vmem [#allocation5], %s315
          %317 = dma.done %s313, 128
        $region44: #{tpu_custom_call.1} parent=39 // pred_fallthru
          _
      $region40: #{tpu_custom_call.1} parent=5 // pred_fallthru
        _
    $region6: #{tpu_custom_call.1} parent=1 // loop_footer
      %s16 = sadd.s32 1, %s12
    $region7: #{tpu_custom_call.1} parent=1 // loop_footer_branch
      %11 = sbr.rel target = $region3
    $region8: #{tpu_custom_call.1} parent=1 // loop_exit
      _
    %318 = vsyncpa [#allocation3], 1
    %s319 = scalar_lea.sflag [#allocation3], 1
    %320 = vsyncpa %s319, 1
    %321 = vsyncpa [#allocation4], 1
    %s322 = scalar_lea.sflag [#allocation4], 1
    %323 = vsyncpa %s322, 1

// kernel: tpu_custom_call.1
$region0: #{tpu_custom_call.1}
  #allocation0 [shape = 'u32[]', space=smem, size = 0x4, offset = 0x4, fixed_abs, tag = 'smem constant byte address 0x4 - core index']
  #allocation1 [shape = 'u32[144,128]{1,0:T(1,128)}', space=vmem, size = 0x12000, scoped, tag = 'internal scratch']
  %s0 = inlined_call_operand.hbm [shape: f32[32,128], index: 0, kind: input, shape index: {}]
  %s1 = inlined_call_operand.vmem [shape: f32[1,32], index: 1, kind: input, shape index: {}]
  %s2 = inlined_call_operand.hbm [shape: f32[2,8,128], index: 2, kind: output, shape index: {}]
  %s3 = sld [smem:[#allocation0]]
  $region45: #{tpu_custom_call.1} parent=0
    _
  %s5 = ssub.s32 1, %s3
  %s6 = scalar_select 0, %s5, %s3
  $region1: #{tpu_custom_call.1} parent=0
    #allocation2 [shape = 'u8[16384]{0}', space=vmem, size = 0x4000, scoped, tag = 'input window, operand 0, single buffered']
    #allocation3 [shape = 's32[2]{0}', space=sflag, size = 0x8, scoped, tag = 'scoped memory for tpu_custom_call.1']
    #allocation4 [shape = 's32[2]{0}', space=sflag, size = 0x8, scoped, tag = 'scoped memory for tpu_custom_call.1']
    #allocation5 [shape = 'u8[8192]{0}', space=vmem, size = 0x2000, scoped, tag = 'output window, operand 0']
    %7 = vsyncpa [#allocation3], 0
    %8 = vsyncpa [#allocation4], 0
    %s9 = scalar_lea.sflag [#allocation4], 1
    %10 = vsyncpa %s9, 0
    loop: start=0, step=1, limit=4
    $region2: #{tpu_custom_call.1} parent=1 // loop_pre_header
      _
    $region3: #{tpu_custom_call.1} parent=1 // loop_header
      %s12 = sphi 0, %s16
      %p13 = scmp.ge.s32.totalorder %s12, 4
      %s20 = sphi 0, %s20
      %s22 = sphi 0, %s20
      %s23 = sphi 0, %s22
      %s37 = sphi 0, %s23
      %s41 = sphi 0, %s41
      %s43 = sphi 0, %s41
      %s44 = sphi 0, %s43
      %s58 = sphi 0, %s44
      %s64 = sphi 0, %s66
      %s67 = sphi 0, %s64
      %s68 = sphi 0, %s67
      %s84 = sphi 0, %s68
    $region4: #{tpu_custom_call.1} parent=1 // loop_header_branch
      %15 = sbr.rel (%p13) target = $region8
    $region5: #{tpu_custom_call.1} parent=1 // loop_body
      %s17 = ssub.s32 %s12, 1
      %s18 = ssub.s32 %s12, 2
      %s19 = sadd.s32 %s12, 1
      %s21 = sadd.s32 %s20, 1
      %p24 = scmp.eq.s32.totalorder %s12, 1
      %p25 = scmp.ne.s32.totalorder %s20, %s22
      %p26 = scmp.eq.s32.totalorder %s12, 0
      %p27 = por %p25, %p26
      %p28 = scmp.ne.s32.totalorder %s20, %s22
      %p29 = scmp.eq.s32.totalorder %s17, 1
      %p30 = por %p28, %p29
      %p31 = scmp.ne.s32.totalorder %s22, %s23
      %p32 = scmp.eq.s32.totalorder %s17, 0
      %p33 = por %p31, %p32
      %p34 = scmp.ne.s32.totalorder %s22, %s23
      %p35 = scmp.eq.s32.totalorder %s18, 1
      %p36 = por %p34, %p35
      %p38 = scmp.ne.s32.totalorder %s23, %s37
      %p39 = scmp.eq.s32.totalorder %s18, 0
      %p40 = por %p38, %p39
      %s42 = sadd.s32 %s41, 1
      %p45 = scmp.eq.s32.totalorder %s12, 1
      %p46 = scmp.ne.s32.totalorder %s41, %s43
      %p47 = scmp.eq.s32.totalorder %s12, 0
      %p48 = por %p46, %p47
      %p49 = scmp.ne.s32.totalorder %s41, %s43
      %p50 = scmp.eq.s32.totalorder %s17, 1
      %p51 = por %p49, %p50
      %p52 = scmp.ne.s32.totalorder %s43, %s44
      %p53 = scmp.eq.s32.totalorder %s17, 0
      %p54 = por %p52, %p53
      %p55 = scmp.ne.s32.totalorder %s43, %s44
      %p56 = scmp.eq.s32.totalorder %s18, 1
      %p57 = por %p55, %p56
      %p59 = scmp.ne.s32.totalorder %s44, %s58
      %p60 = scmp.eq.s32.totalorder %s18, 0
      %p61 = por %p59, %p60
      %s62 = ssub.s32 %s12, %s19
      %p63 = scmp.eq.s32.totalorder %s62, 0
      %s65 = sadd.s32 %s64, 1
      %s66 = scalar_select %p63, %s64, %s65
      %p69 = pneg %p63
      %p70 = scmp.eq.s32.totalorder %s12, 1
      %p71 = por %p69, %p70
      %p72 = scmp.ne.s32.totalorder %s64, %s67
      %p73 = scmp.eq.s32.totalorder %s12, 0
      %p74 = por %p72, %p73
      %p75 = scmp.ne.s32.totalorder %s64, %s67
      %p76 = scmp.eq.s32.totalorder %s17, 1
      %p77 = por %p75, %p76
      %p78 = scmp.ne.s32.totalorder %s67, %s68
      %p79 = scmp.eq.s32.totalorder %s17, 0
      %p80 = por %p78, %p79
      %p81 = scmp.ne.s32.totalorder %s67, %s68
      %p82 = scmp.eq.s32.totalorder %s18, 1
      %p83 = por %p81, %p82
      %p85 = scmp.ne.s32.totalorder %s68, %s84
      %p86 = scmp.eq.s32.totalorder %s18, 0
      %p87 = por %p85, %p86
      %p88 = scmp.le.s32.totalorder 1, %s12
      %p89 = scmp.lt.s32.totalorder %s12, 3
      %p90 = pnand %p88, %p89
      %p91 = pneg %p90
      // Predicated region
      $region9: #{tpu_custom_call.1} parent=5 // pred_check
        _
      $region10: #{tpu_custom_call.1} parent=5 // pred_check_branch
        %93 = sbr.rel (%p90) target = $region12
      $region11: #{tpu_custom_call.1} parent=5 // pred_region
        %s94 = ssub.s32 %s12, 1
        // Predicated region
        $region13: #{tpu_custom_call.1} parent=11 // pred_check
          %p95 = pneg %p33
        $region14: #{tpu_custom_call.1} parent=11 // pred_check_branch
          %97 = sbr.rel (%p95) target = $region16
        $region15: #{tpu_custom_call.1} parent=11 // pred_region
          %s99 = ssub.s32 512, 512
          %100 = vsyncadd [#allocation3], %s99
          %s101 = sshll.u32 [#allocation2], 4
          %s102 = int_to_ptr.vmem [resolvable:$true] %s101
          %107 = dma.hbm_to_vmem [thread:$0]  %s0, 512, %s102, [#allocation3], 128, 128, 8
        $region16: #{tpu_custom_call.1} parent=11 // pred_fallthru
          _
        // Predicated region
        $region17: #{tpu_custom_call.1} parent=11 // pred_check
          %p108 = pneg %p54
        $region18: #{tpu_custom_call.1} parent=11 // pred_check_branch
          %110 = sbr.rel (%p108) target = $region20
        $region19: #{tpu_custom_call.1} parent=11 // pred_region
          _
        $region20: #{tpu_custom_call.1} parent=11 // pred_fallthru
          _
      $region12: #{tpu_custom_call.1} parent=5 // pred_fallthru
        _
      %p111 = scmp.lt.s32.totalorder %s12, 2
      // Predicated region
      $region21: #{tpu_custom_call.1} parent=5 // pred_check
        %p112 = pneg %p111
      $region22: #{tpu_custom_call.1} parent=5 // pred_check_branch
        %114 = sbr.rel (%p112) target = $region24
      $region23: #{tpu_custom_call.1} parent=5 // pred_region
        _
      $region24: #{tpu_custom_call.1} parent=5 // pred_fallthru
        _
      %p115 = scmp.le.s32.totalorder 1, %s12
      %p116 = scmp.lt.s32.totalorder %s12, 3
      %p117 = pnand %p115, %p116
      %p118 = pneg %p117
      // Predicated region
      $region25: #{tpu_custom_call.1} parent=5 // pred_check
        _
      $region26: #{tpu_custom_call.1} parent=5 // pred_check_branch
        %120 = sbr.rel (%p117) target = $region28
      $region27: #{tpu_custom_call.1} parent=5 // pred_region
        %s121 = ssub.s32 %s12, 1
        // Predicated region
        $region29: #{tpu_custom_call.1} parent=27 // pred_check
          %p122 = pneg %p33
        $region30: #{tpu_custom_call.1} parent=27 // pred_check_branch
          %124 = sbr.rel (%p122) target = $region32
        $region31: #{tpu_custom_call.1} parent=27 // pred_region
          %125 = dma.done [#allocation3], 512
        $region32: #{tpu_custom_call.1} parent=27 // pred_fallthru
          _
        %p126 = pneg %p33
        %p127 = pneg %p30
        %p128 = pneg %p54
        %p129 = pneg %p51
        %p130 = pneg %p80
        %p131 = pneg %p77
        %s132 = sand.u32 %s67, 1
        %s133 = scalar_lea.sflag [#allocation4], %s132
        %s134 = sand.u32 %s67, 1
        %s135 = smul.addr %s134, 8
        %s136 = scalar_lea.vmem [#allocation5], %s135
        %s137 = smul.u32 %s17, 16
        %s138 = scalar_lea.vmem [#allocation2], %s137
        %v139 = vld [vmem:[%s138] sm:$0xff]
        %v140 = vld [vmem:[%s138 + $0x8] sm:$0xff]
        %v141 = vld [vmem:[#allocation2] sm:$0xff]
        %v142 = vld [vmem:[#allocation2 + $0x8] sm:$0xff]
        %v143 = vld [vmem:[#allocation2 + $0x10] sm:$0xff]
        %v144 = vld [vmem:[#allocation2 + $0x18] sm:$0xff]
        %145 = vmatprep.subr.mxu0 0.0
        %146 = vmatpush1.xpose.msra.mxu0 0.0
        %147 = vmatprep.subr.mxu0 0.0
        %148 = vmatpush1.xpose.msra.mxu0 0.0
        %149 = vmatprep.subr.mxu0 0.0
        %150 = vmatpush1.xpose.msra.mxu0 0.0
        %151 = vmatprep.subr.mxu0 0.0
        %152 = vmatpush1.xpose.msra.mxu0 0.0
        %153 = vmatprep.subr.mxu0 0.0
        %154 = vmatpush1.xpose.msra.mxu0 0.0
        %155 = vmatprep.subr.mxu0 0.0
        %156 = vmatpush1.xpose.msra.mxu0 0.0
        %157 = vmatprep.subr.mxu0 0.0
        %158 = vmatpush1.xpose.msra.mxu0 0.0
        %159 = vmatprep.subr.mxu0 0.0
        %160 = vmatpush1.xpose.msra.mxu0 0.0
        %161 = vmatprep.subr.mxu0 0.0
        %162 = vmatpush1.xpose.msra.mxu0 0.0
        %163 = vmatprep.subr.mxu0 0.0
        %164 = vmatpush1.xpose.msra.mxu0 0.0
        %165 = vmatprep.subr.mxu0 0.0
        %166 = vmatpush1.xpose.msra.mxu0 0.0
        %167 = vmatprep.subr.mxu0 0.0
        %168 = vmatpush1.xpose.msra.mxu0 0.0
        %169 = vmatprep.subr.mxu0 0.0
        %170 = vmatpush1.xpose.msra.mxu0 %v144
        %171 = vmatprep.subr.mxu0 0.0
        %172 = vmatpush1.xpose.msra.mxu0 %v143
        %173 = vmatprep.subr.mxu0 0.0
        %174 = vmatpush1.xpose.msra.mxu0 %v142
        %175 = vmatprep.subr.mxu0 0.0
        %176 = vmatpush1.xpose.msra.mxu0 %v141
        %177 = vmatprep.subr.mxu0 0.0
        %178 = vmatpush2.xpose.msra.mxu0 0.0
        %179 = vmatprep.subr.mxu0 0.0
        %180 = vmatpush2.xpose.msra.mxu0 0.0
        %181 = vmatprep.subr.mxu0 0.0
        %182 = vmatpush2.xpose.msra.mxu0 0.0
        %183 = vmatprep.subr.mxu0 0.0
        %184 = vmatpush2.xpose.msra.mxu0 0.0
        %185 = vmatprep.subr.mxu0 0.0
        %186 = vmatpush2.xpose.msra.mxu0 0.0
        %187 = vmatprep.subr.mxu0 0.0
        %188 = vmatpush2.xpose.msra.mxu0 0.0
        %189 = vmatprep.subr.mxu0 0.0
        %190 = vmatpush2.xpose.msra.mxu0 0.0
        %191 = vmatprep.subr.mxu0 0.0
        %192 = vmatpush2.xpose.msra.mxu0 0.0
        %193 = vmatprep.subr.mxu0 0.0
        %194 = vmatpush2.xpose.msra.mxu0 0.0
        %195 = vmatprep.subr.mxu0 0.0
        %196 = vmatpush2.xpose.msra.mxu0 0.0
        %197 = vmatprep.subr.mxu0 0.0
        %198 = vmatpush2.xpose.msra.mxu0 0.0
        %199 = vmatprep.subr.mxu0 0.0
        %200 = vmatpush2.xpose.msra.mxu0 0.0
        %201 = vmatprep.subr.mxu0 0.0
        %202 = vmatpush2.xpose.msra.mxu0 0.0
        %203 = vmatprep.subr.mxu0 0.0
        %204 = vmatpush2.xpose.msra.mxu0 0.0
        %205 = vmatprep.subr.mxu0 0.0
        %206 = vmatpush2.xpose.msra.mxu0 0.0
        %207 = vmatprep.subr.mxu0 0.0
        %208 = vmatpush2.xpose.msra.mxu0 0.0
        %209 = vmatprep.mubr.f32.mxu0 0.0
        %210 = vmatmul.mubr.f32.gmra.mxu0 %v139
        %v211 = vpop.f32.mrf.mxu0
        %v212 = vadd.f32 0.0, %v211
        %v213 = vpop.f32.mrf.mxu0
        %214 = vmatprep.mubr.f32.mxu0 0.0
        %215 = vmatmul.mubr.f32.gmra.mxu0 %v140
        %v216 = vpop.f32.mrf.mxu0
        %v217 = vadd.f32 0.0, %v216
        %v218 = vpop.f32.mrf.mxu0
        %219 = vdwg.mxu0
        %s220 = sadd.s32 %s137, 16
        %p221 = scmp.ge.s32.totalorder %s220, 32
        %s222 = sadd.s32 %s137, 4294967280
        %s223 = scalar_select %p221, %s222, %s220
        %s224 = scalar_lea.vmem [#allocation2], %s223
        %v225 = vld [vmem:[%s224] sm:$0xff]
        %v226 = vld [vmem:[%s224 + $0x8] sm:$0xff]
        %v227 = vmul.f32 %v139, %v225
        %v228 = vmul.f32 %v140, %v226
        %229 = vadd.xlane.f32.xlu0 %v227
        %v230 = vpop.xlane.xlu0 %229
        %231 = vadd.xlane.f32.xlu0 %v228
        %v232 = vpop.xlane.xlu0 %231
        %v233 = vmul.f32 %v139, %v139
        %v234 = vmul.f32 %v140, %v140
        %235 = vadd.xlane.f32.xlu0 %v233
        %v236 = vpop.xlane.xlu0 %235
        %237 = vadd.xlane.f32.xlu0 %v234
        %v238 = vpop.xlane.xlu0 %237
        %vm239 = vcmask 261120
        %v240 = vsel %vm239, %v212, -inf
        %241 = vmax.xlane.f32.xlu0 %v240
        %v242 = vpop.xlane.xlu0 %241
        %v243 = vsel %vm239, %v217, -inf
        %244 = vmax.xlane.f32.xlu0 %v243
        %v245 = vpop.xlane.xlu0 %244
        %v246 = vmax.f32 %v242, %v236
        %v247 = vmax.f32 %v245, %v238
        %v248 = vsub.f32 %v212, %v246
        %v249 = vsub.f32 %v217, %v247
        %v250 = vmul.f32 %v248, 1.442695
        %v251 = vpow.pop %v250
        %v252 = vmul.f32 %v249, 1.442695
        %v253 = vpow.pop %v252
        %v254 = vsel %vm239, %v251, 0.0
        %255 = vadd.xlane.f32.xlu0 %v254
        %v256 = vpop.xlane.xlu0 %255
        %v257 = vsel %vm239, %v253, 0.0
        %258 = vadd.xlane.f32.xlu0 %v257
        %v259 = vpop.xlane.xlu0 %258
        %v260 = vsub.f32 %v236, %v246
        %v261 = vsub.f32 %v238, %v247
        %v262 = vmul.f32 %v260, 1.442695
        %v263 = vpow.pop %v262
        %v264 = vmul.f32 %v261, 1.442695
        %v265 = vpow.pop %v264
        %v266 = vsub.f32 %v256, %v263
        %v267 = vsub.f32 %v259, %v265
        %v268 = vmax.f32 %v266, 1e-30
        %v269 = vmax.f32 %v267, 1e-30
        %v270 = vlog2.pop %v268
        %v271 = vmul.f32 %v270, 0.6931472
        %v272 = vlog2.pop %v269
        %v273 = vmul.f32 %v272, 0.6931472
        %v274 = vadd.f32 %v246, %v271
        %v275 = vadd.f32 %v247, %v273
        %v276 = vsub.f32 %v274, %v230
        %v277 = vsub.f32 %v275, %v232
        %v278 = vadd.f32 %v276, %v277
        %v279 = vrot.slane %v278, 4
        %v280 = vadd.f32 %v278, %v279
        %v281 = vrot.slane %v280, 2
        %v282 = vadd.f32 %v280, %v281
        %v283 = vrot.slane %v282, 1
        %v284 = vadd.f32 %v282, %v283
        %285 = vst [vmem:[%s136] sm:$0xff] %v284
        %s286 = sand.u32 %s67, 1
        %s287 = scalar_lea.sflag [#allocation4], %s286
        %s288 = sand.u32 %s67, 1
        %s289 = smul.addr %s288, 8
        %s290 = scalar_lea.vmem [#allocation5], %s289
        // Predicated region
        $region33: #{tpu_custom_call.1} parent=27 // pred_check
          %p291 = pneg %p77
        $region34: #{tpu_custom_call.1} parent=27 // pred_check_branch
          %293 = sbr.rel (%p291) target = $region36
        $region35: #{tpu_custom_call.1} parent=27 // pred_region
          %s295 = ssub.s32 128, 128
          %296 = vsyncadd %s287, %s295
          %s297 = smul.addr %s17, 128
          %s298 = scalar_lea.hbm %s2, %s297
          %s300 = sshll.u32 %s290, 4
          %s301 = int_to_ptr.vmem [resolvable:$true] %s300
          %303 = dma.vmem_to_hbm [thread:$0]  %s301, 128, %s298, %s287
        $region36: #{tpu_custom_call.1} parent=27 // pred_fallthru
          _
      $region28: #{tpu_custom_call.1} parent=5 // pred_fallthru
        _
      %p304 = scmp.le.s32.totalorder 2, %s12
      // Predicated region
      $region37: #{tpu_custom_call.1} parent=5 // pred_check
        %p305 = pneg %p304
      $region38: #{tpu_custom_call.1} parent=5 // pred_check_branch
        %307 = sbr.rel (%p305) target = $region40
      $region39: #{tpu_custom_call.1} parent=5 // pred_region
        %s308 = ssub.s32 %s12, 2
        // Predicated region
        $region41: #{tpu_custom_call.1} parent=39 // pred_check
          %p309 = pneg %p83
        $region42: #{tpu_custom_call.1} parent=39 // pred_check_branch
          %311 = sbr.rel (%p309) target = $region44
        $region43: #{tpu_custom_call.1} parent=39 // pred_region
          %s312 = sand.u32 %s68, 1
          %s313 = scalar_lea.sflag [#allocation4], %s312
          %s314 = sand.u32 %s68, 1
          %s315 = smul.addr %s314, 8
          %s316 = scalar_lea.vmem [#allocation5], %s315
          %317 = dma.done %s313, 128
        $region44: #{tpu_custom_call.1} parent=39 // pred_fallthru
          _
      $region40: #{tpu_custom_call.1} parent=5 // pred_fallthru
        _
    $region6: #{tpu_custom_call.1} parent=1 // loop_footer
      %s16 = sadd.s32 1, %s12
    $region7: #{tpu_custom_call.1} parent=1 // loop_footer_branch
      %11 = sbr.rel target = $region3
    $region8: #{tpu_custom_call.1} parent=1 // loop_exit
      _
    %318 = vsyncpa [#allocation3], 1
    %s319 = scalar_lea.sflag [#allocation3], 1
    %320 = vsyncpa %s319, 1
    %321 = vsyncpa [#allocation4], 1
    %s322 = scalar_lea.sflag [#allocation4], 1
    %323 = vsyncpa %s322, 1

</llo_original>
